<compile_context>
chip_gen: v7x
topology: tpu7x:2x2x1
jax: 0.10.0
libtpu: 0.0.40
codegen_flags: <defaults>
</compile_context>

<pallas_src>
import functools

import jax
import jax.numpy as jnp
from jax import lax
from jax.experimental import pallas as pl
from jax.experimental.pallas import tpu as pltpu


def _round_up(x, m):
    return ((x + m - 1) // m) * m


def _cdiv(a, b):
    return (a + b - 1) // b


def _default_num_groups():
    """2 parallel groups on megacore chips (2 TCs/device), else 1."""
    try:
        kind = jax.devices()[0].device_kind.lower()
    except Exception:
        return 1
    return 2 if ("v7" in kind or "tpu7" in kind or "v4" in kind) else 1


def _varifocal_kernel(pred_ref, gt_ref, label_ref, out_ref, acc_ref, *,
                      alpha, gamma, inv_c, n_rows, block_n, sub_rows,
                      tiles_per_group):
    g = pl.program_id(0)
    t = pl.program_id(1)
    c = pred_ref.shape[1]

    tile_start = (g * tiles_per_group + t) * block_n
    tile_end = tile_start + block_n
    n_sub = block_n // sub_rows

    # Reset the resident vector accumulator at the start of each group's sweep.
    @pl.when(t == 0)
    def _():
        acc_ref[...] = jnp.zeros_like(acc_ref)

    def sub_block(i, masked):
        r0 = pl.multiple_of(i * sub_rows, sub_rows)
        x = pred_ref[pl.ds(r0, sub_rows), :].astype(jnp.float32)    # logits
        z = gt_ref[pl.ds(r0, sub_rows), :].astype(jnp.float32)      # targets
        lab = label_ref[pl.ds(r0, sub_rows), :].astype(jnp.float32)

        # Shared transcendental: e = exp(-|x|) feeds both sigmoid and softplus.
        e = jnp.exp(-jnp.abs(x))
        softplus = jnp.log1p(e)                               # log(1+exp(-|x|))
        # Stable sigmoid; approx reciprocal runs on the EUP slot (VALU relief).
        sig = jnp.where(x >= 0.0, 1.0, e) * pl.reciprocal(1.0 + e, approx=True)
        sig_pow = sig * sig if gamma == 2.0 else sig ** gamma

        # weight = alpha*sig^g*(1-lab) + z*lab  ==  w0 + lab*(z - w0)
        w0 = alpha * sig_pow
        weight = w0 + lab * (z - w0)

        # BCE with logits, reduction='none': max(x,0) - x*z + log1p(exp(-|x|))
        bce = jnp.maximum(x, 0.0) - x * z + softplus
        out = bce * weight

        if masked:  # only traced for the boundary tile
            rows = tile_start + r0 + lax.broadcasted_iota(jnp.int32, out.shape, 0)
            out = jnp.where(rows < n_rows, out, 0.0)
        return out

    def run(masked):
        def body(i, acc):
            return acc + sub_block(i, masked)
        acc = lax.fori_loop(0, n_sub, body,
                            jnp.zeros((sub_rows, c), jnp.float32))
        acc_ref[...] += acc

    # Full tile: no masking overhead on the common path.
    @pl.when(tile_end <= n_rows)
    def _():
        run(False)

    # Boundary tile: mask rows >= n_rows (OOB rows of the partial block are
    # unspecified; the select forces their contribution to exactly 0).
    @pl.when(jnp.logical_and(tile_start < n_rows, tile_end > n_rows))
    def _():
        run(True)

    # Tiles entirely past n_rows (from group rounding) are skipped entirely.

    # Single cross-lane/sublane reduce per group; apply 1/C (mean over dim 1)
    # once to the total instead of per row.
    @pl.when(t == pl.num_programs(1) - 1)
    def _():
        total = jnp.sum(acc_ref[...], keepdims=True) * inv_c    # (1, 1)
        out_ref[...] = total.reshape(1, 1, 1)


def varifocal_loss(pred_score, gt_score, label, alpha=0.75, gamma=2.0,
                   block_n=2048, num_groups=None):
    """Pallas implementation of VarifocalLoss.forward (returns a scalar).

    Inputs may be f32 / bf16 / f16; they are up-cast to f32 inside the kernel
    (pass bf16 to halve HBM traffic — the kernel is bandwidth-bound).
    """
    assert pred_score.shape == gt_score.shape == label.shape
    assert pred_score.ndim == 2
    N, C = map(int, pred_score.shape)

    itemsize = max(jnp.dtype(pred_score.dtype).itemsize,
                   jnp.dtype(gt_score.dtype).itemsize,
                   jnp.dtype(label.dtype).itemsize)
    c_pad = _round_up(C, 128)

    # Row tile: large (amortizes per-step pipeline overhead), a multiple of 32
    # sublanes (legal for f32 and bf16 blocks), never larger than N, and small
    # enough that 3 double-buffered input streams stay within ~12 MiB (fits the
    # v5e 16 MiB scoped-VMEM default; v6e/v7x have more headroom).
    budget = 12 * 1024 * 1024
    max_rows = max(32, (budget // (3 * 2 * c_pad * itemsize)) // 32 * 32)
    if N >= 32:
        block_n = min(max(32, (int(block_n) // 32) * 32), (N // 32) * 32, max_rows)
        sub_rows = min(32, block_n)      # divides block_n (block_n % 32 == 0)
    else:
        block_n = N                      # full-dim block is always legal
        sub_rows = N

    n_blocks = _cdiv(N, block_n)
    if num_groups is None:
        num_groups = _default_num_groups()
    groups = max(1, min(int(num_groups), n_blocks))
    tiles_per_group = _cdiv(n_blocks, groups)
    last_block = n_blocks - 1

    def in_map(g, t):
        # Group rounding can create tiles entirely past N; clamp their block
        # index so the auto-DMA stays in bounds (their compute is skipped).
        return (jnp.minimum(g * tiles_per_group + t, last_block), 0)

    kernel = functools.partial(
        _varifocal_kernel,
        alpha=float(alpha), gamma=float(gamma), inv_c=1.0 / float(C),
        n_rows=N, block_n=block_n, sub_rows=sub_rows,
        tiles_per_group=tiles_per_group)

    partials = pl.pallas_call(
        kernel,
        out_shape=jax.ShapeDtypeStruct((groups, 1, 1), jnp.float32),
        grid_spec=pltpu.PrefetchScalarGridSpec(
            num_scalar_prefetch=0,
            grid=(groups, tiles_per_group),
            in_specs=[
                pl.BlockSpec((block_n, C), in_map),   # pred_score
                pl.BlockSpec((block_n, C), in_map),   # gt_score
                pl.BlockSpec((block_n, C), in_map),   # label
            ],
            out_specs=pl.BlockSpec((1, 1, 1), lambda g, t: (g, 0, 0)),
            scratch_shapes=[pltpu.VMEM((sub_rows, C), jnp.float32)],
        ),
        compiler_params=pltpu.CompilerParams(
            dimension_semantics=("parallel", "arbitrary")),
    )(pred_score, gt_score, label)

    # Sum the tiny per-group partials.
    return jnp.sum(partials)


def _varifocal_loss_ref(pred_score, gt_score, label, alpha=0.75, gamma=2.0):
    """Pure-JAX reference mirroring the PyTorch forward."""
    weight = (alpha * jax.nn.sigmoid(pred_score) ** gamma * (1.0 - label)
              + gt_score * label)
    x = pred_score.astype(jnp.float32)
    z = gt_score.astype(jnp.float32)
    bce = jnp.maximum(x, 0.0) - x * z + jnp.log1p(jnp.exp(-jnp.abs(x)))
    return jnp.sum(jnp.mean(bce * weight, axis=1))


if __name__ == "__main__":
    # VarifocalLoss is stateless -- nothing to initialize.
    key = jax.random.PRNGKey(0)
    k1, k2, k3 = jax.random.split(key, 3)

    N, C = 300, 80   # anchors x classes (COCO-like); exercises the ragged tail
    pred_score = jax.random.normal(k1, (N, C), dtype=jnp.float32) * 2.0
    gt_score = jax.random.uniform(k2, (N, C), dtype=jnp.float32)
    label = (jax.random.uniform(k3, (N, C)) > 0.9).astype(jnp.float32)

    ref = _varifocal_loss_ref(pred_score, gt_score, label)

    # Default config: auto tile size / group count (ragged last tile is masked
    # in-kernel, no wrapper padding).  Approx reciprocal in the sigmoid gives a
    # small deviation from the exact-divide reference, hence the tolerance.
    loss = jax.block_until_ready(varifocal_loss(pred_score, gt_score, label))
    assert jnp.allclose(loss, ref, rtol=5e-3, atol=1e-3), (loss, ref)

    # Multi-tile + 2 parallel groups: exercises the accumulator sweep, the
    # in-kernel tail masking and the clamped/skipped padding tile.
    loss2 = jax.block_until_ready(
        varifocal_loss(pred_score, gt_score, label, block_n=64, num_groups=2))
    assert jnp.allclose(loss2, ref, rtol=5e-3, atol=1e-3), (loss2, ref)

    print("KERNEL_OK")
</pallas_src>

<mosaic_0001>
module attributes {stable_mosaic.version = 11 : i64} {
  func.func @_varifocal_kernel(%arg0: i32, %arg1: i32, %arg2: memref<288x80xf32, #tpu.memory_space<vmem>>, %arg3: memref<288x80xf32, #tpu.memory_space<vmem>>, %arg4: memref<288x80xf32, #tpu.memory_space<vmem>>, %arg5: memref<1x1x1xf32, #tpu.memory_space<vmem>>, %arg6: memref<32x80xf32, #tpu.memory_space<vmem>>) attributes {dimension_semantics = [#tpu.dimension_semantics<parallel>, #tpu.dimension_semantics<arbitrary>], iteration_bounds = array<i64: 1, 2>, scalar_prefetch = 0 : i64, scratch_operands = 1 : i64, tpu.core_type = #tpu.core_type<tc>, window_params = [{transform_indices = @transform_0, window_bounds = array<i64: 288, 80>}, {transform_indices = @transform_1, window_bounds = array<i64: 288, 80>}, {transform_indices = @transform_2, window_bounds = array<i64: 288, 80>}, {transform_indices = @transform_3, window_bounds = array<i64: 1, 1, 1>}]} {
    %c2_i32 = arith.constant 2 : i32
    %0 = arith.muli %arg0, %c2_i32 : i32
    %1 = arith.addi %0, %arg1 : i32
    %c288_i32 = arith.constant 288 : i32
    %2 = arith.muli %1, %c288_i32 : i32
    %c288_i32_0 = arith.constant 288 : i32
    %3 = arith.addi %2, %c288_i32_0 : i32
    %c0_i32 = arith.constant 0 : i32
    %4 = arith.cmpi eq, %arg1, %c0_i32 : i32
    %5 = arith.extui %4 : i1 to i32
    %c0_i32_1 = arith.constant 0 : i32
    %6 = arith.cmpi ne, %5, %c0_i32_1 : i32
    scf.if %6 {
      %cst = arith.constant 0.000000e+00 : f32
      %18 = vector.broadcast %cst : f32 to vector<32x80xf32>
      %c0 = arith.constant 0 : index
      %c0_7 = arith.constant 0 : index
      %19 = vector.load %arg6[%c0, %c0_7] : memref<32x80xf32, #tpu.memory_space<vmem>>, vector<32x80xf32>
      tpu.vector_store %arg6[%c0, %c0_7], %18 {strides = array<i32>} : memref<32x80xf32, #tpu.memory_space<vmem>>, vector<32x80xf32>,
    } else {
    }
    %c300_i32 = arith.constant 300 : i32
    %7 = arith.cmpi sle, %3, %c300_i32 : i32
    %8 = arith.extui %7 : i1 to i32
    %c0_i32_2 = arith.constant 0 : i32
    %9 = arith.cmpi ne, %8, %c0_i32_2 : i32
    scf.if %9 {
      %cst = arith.constant 0.000000e+00 : f32
      %18 = vector.broadcast %cst : f32 to vector<32x80xf32>
      %c0_i32_7 = arith.constant 0 : i32
      %c9_i32 = arith.constant 9 : i32
      %19 = arith.addi %c0_i32_7, %c9_i32 : i32
      %c1_i32_8 = arith.constant 1 : i32
      %20 = scf.for %arg7 = %c0_i32_7 to %19 step %c1_i32_8 iter_args(%arg8 = %18) -> (vector<32x80xf32>)  : i32 {
        %c32_i32 = arith.constant 32 : i32
        %24 = arith.muli %arg7, %c32_i32 : i32
        %25 = tpu.assume_multiple %24, 32 : i32
        %26 = arith.index_cast %25 : i32 to index
        %c0_13 = arith.constant 0 : index
        %27 = vector.load %arg2[%26, %c0_13] : memref<288x80xf32, #tpu.memory_space<vmem>>, vector<32x80xf32>
        %28 = arith.index_cast %25 : i32 to index
        %c0_14 = arith.constant 0 : index
        %29 = vector.load %arg3[%28, %c0_14] : memref<288x80xf32, #tpu.memory_space<vmem>>, vector<32x80xf32>
        %30 = arith.index_cast %25 : i32 to index
        %c0_15 = arith.constant 0 : index
        %31 = vector.load %arg4[%30, %c0_15] : memref<288x80xf32, #tpu.memory_space<vmem>>, vector<32x80xf32>
        %32 = math.absf %27 : vector<32x80xf32>
        %cst_16 = arith.constant 0.000000e+00 : f32
        %33 = vector.broadcast %cst_16 : f32 to vector<32x80xf32>
        %34 = arith.subf %33, %32 : vector<32x80xf32>
        %35 = math.exp %34 : vector<32x80xf32>
        %36 = math.log1p %35 : vector<32x80xf32>
        %cst_17 = arith.constant 0.000000e+00 : f32
        %37 = vector.broadcast %cst_17 : f32 to vector<32x80xf32>
        %38 = arith.cmpf oge, %27, %37 : vector<32x80xf32>
        %cst_18 = arith.constant 1.000000e+00 : f32
        %39 = vector.broadcast %cst_18 : f32 to vector<32x80xf32>
        %40 = arith.select %38, %39, %35 : vector<32x80xi1>, vector<32x80xf32>
        %cst_19 = arith.constant 1.000000e+00 : f32
        %41 = vector.broadcast %cst_19 : f32 to vector<32x80xf32>
        %42 = arith.addf %41, %35 : vector<32x80xf32>
        %43 = tpu.reciprocal %42 {approx = true} : vector<32x80xf32> -> vector<32x80xf32>
        %44 = arith.mulf %40, %43 : vector<32x80xf32>
        %45 = arith.mulf %44, %44 : vector<32x80xf32>
        %cst_20 = arith.constant 7.500000e-01 : f32
        %46 = vector.broadcast %cst_20 : f32 to vector<32x80xf32>
        %47 = arith.mulf %46, %45 : vector<32x80xf32>
        %48 = arith.subf %29, %47 : vector<32x80xf32>
        %49 = arith.mulf %31, %48 : vector<32x80xf32>
        %50 = arith.addf %47, %49 : vector<32x80xf32>
        %cst_21 = arith.constant 0.000000e+00 : f32
        %51 = vector.broadcast %cst_21 : f32 to vector<32x80xf32>
        %52 = arith.maximumf %27, %51 : vector<32x80xf32>
        %53 = arith.mulf %27, %29 : vector<32x80xf32>
        %54 = arith.subf %52, %53 : vector<32x80xf32>
        %55 = arith.addf %54, %36 : vector<32x80xf32>
        %56 = arith.mulf %55, %50 : vector<32x80xf32>
        %57 = arith.addf %arg8, %56 : vector<32x80xf32>
        scf.yield %57 : vector<32x80xf32>
      }
      %c9_i32_9 = arith.constant 9 : i32
      %c0 = arith.constant 0 : index
      %c0_10 = arith.constant 0 : index
      %21 = vector.load %arg6[%c0, %c0_10] : memref<32x80xf32, #tpu.memory_space<vmem>>, vector<32x80xf32>
      %22 = arith.addf %21, %20 : vector<32x80xf32>
      %c0_11 = arith.constant 0 : index
      %c0_12 = arith.constant 0 : index
      %23 = vector.load %arg6[%c0_11, %c0_12] : memref<32x80xf32, #tpu.memory_space<vmem>>, vector<32x80xf32>
      tpu.vector_store %arg6[%c0_11, %c0_12], %22 {strides = array<i32>} : memref<32x80xf32, #tpu.memory_space<vmem>>, vector<32x80xf32>,
    } else {
    }
    %c300_i32_3 = arith.constant 300 : i32
    %10 = arith.cmpi slt, %2, %c300_i32_3 : i32
    %c300_i32_4 = arith.constant 300 : i32
    %11 = arith.cmpi sgt, %3, %c300_i32_4 : i32
    %12 = arith.andi %10, %11 : i1
    %13 = arith.extui %12 : i1 to i32
    %c0_i32_5 = arith.constant 0 : i32
    %14 = arith.cmpi ne, %13, %c0_i32_5 : i32
    scf.if %14 {
      %cst = arith.constant 0.000000e+00 : f32
      %18 = vector.broadcast %cst : f32 to vector<32x80xf32>
      %c0_i32_7 = arith.constant 0 : i32
      %c9_i32 = arith.constant 9 : i32
      %19 = arith.addi %c0_i32_7, %c9_i32 : i32
      %c1_i32_8 = arith.constant 1 : i32
      %20 = scf.for %arg7 = %c0_i32_7 to %19 step %c1_i32_8 iter_args(%arg8 = %18) -> (vector<32x80xf32>)  : i32 {
        %c32_i32 = arith.constant 32 : i32
        %24 = arith.muli %arg7, %c32_i32 : i32
        %25 = tpu.assume_multiple %24, 32 : i32
        %26 = arith.index_cast %25 : i32 to index
        %c0_13 = arith.constant 0 : index
        %27 = vector.load %arg2[%26, %c0_13] : memref<288x80xf32, #tpu.memory_space<vmem>>, vector<32x80xf32>
        %28 = arith.index_cast %25 : i32 to index
        %c0_14 = arith.constant 0 : index
        %29 = vector.load %arg3[%28, %c0_14] : memref<288x80xf32, #tpu.memory_space<vmem>>, vector<32x80xf32>
        %30 = arith.index_cast %25 : i32 to index
        %c0_15 = arith.constant 0 : index
        %31 = vector.load %arg4[%30, %c0_15] : memref<288x80xf32, #tpu.memory_space<vmem>>, vector<32x80xf32>
        %32 = math.absf %27 : vector<32x80xf32>
        %cst_16 = arith.constant 0.000000e+00 : f32
        %33 = vector.broadcast %cst_16 : f32 to vector<32x80xf32>
        %34 = arith.subf %33, %32 : vector<32x80xf32>
        %35 = math.exp %34 : vector<32x80xf32>
        %36 = math.log1p %35 : vector<32x80xf32>
        %cst_17 = arith.constant 0.000000e+00 : f32
        %37 = vector.broadcast %cst_17 : f32 to vector<32x80xf32>
        %38 = arith.cmpf oge, %27, %37 : vector<32x80xf32>
        %cst_18 = arith.constant 1.000000e+00 : f32
        %39 = vector.broadcast %cst_18 : f32 to vector<32x80xf32>
        %40 = arith.select %38, %39, %35 : vector<32x80xi1>, vector<32x80xf32>
        %cst_19 = arith.constant 1.000000e+00 : f32
        %41 = vector.broadcast %cst_19 : f32 to vector<32x80xf32>
        %42 = arith.addf %41, %35 : vector<32x80xf32>
        %43 = tpu.reciprocal %42 {approx = true} : vector<32x80xf32> -> vector<32x80xf32>
        %44 = arith.mulf %40, %43 : vector<32x80xf32>
        %45 = arith.mulf %44, %44 : vector<32x80xf32>
        %cst_20 = arith.constant 7.500000e-01 : f32
        %46 = vector.broadcast %cst_20 : f32 to vector<32x80xf32>
        %47 = arith.mulf %46, %45 : vector<32x80xf32>
        %48 = arith.subf %29, %47 : vector<32x80xf32>
        %49 = arith.mulf %31, %48 : vector<32x80xf32>
        %50 = arith.addf %47, %49 : vector<32x80xf32>
        %cst_21 = arith.constant 0.000000e+00 : f32
        %51 = vector.broadcast %cst_21 : f32 to vector<32x80xf32>
        %52 = arith.maximumf %27, %51 : vector<32x80xf32>
        %53 = arith.mulf %27, %29 : vector<32x80xf32>
        %54 = arith.subf %52, %53 : vector<32x80xf32>
        %55 = arith.addf %54, %36 : vector<32x80xf32>
        %56 = arith.mulf %55, %50 : vector<32x80xf32>
        %57 = arith.addi %2, %25 : i32
        %58 = tpu.iota {dimensions = array<i32: 0>} : vector<32x80xi32>
        %59 = vector.broadcast %57 : i32 to vector<32x80xi32>
        %60 = arith.addi %59, %58 : vector<32x80xi32>
        %c300_i32_22 = arith.constant 300 : i32
        %61 = vector.broadcast %c300_i32_22 : i32 to vector<32x80xi32>
        %62 = arith.cmpi slt, %60, %61 : vector<32x80xi32>
        %cst_23 = arith.constant 0.000000e+00 : f32
        %63 = vector.broadcast %cst_23 : f32 to vector<32x80xf32>
        %64 = arith.select %62, %56, %63 : vector<32x80xi1>, vector<32x80xf32>
        %65 = arith.addf %arg8, %64 : vector<32x80xf32>
        scf.yield %65 : vector<32x80xf32>
      }
      %c9_i32_9 = arith.constant 9 : i32
      %c0 = arith.constant 0 : index
      %c0_10 = arith.constant 0 : index
      %21 = vector.load %arg6[%c0, %c0_10] : memref<32x80xf32, #tpu.memory_space<vmem>>, vector<32x80xf32>
      %22 = arith.addf %21, %20 : vector<32x80xf32>
      %c0_11 = arith.constant 0 : index
      %c0_12 = arith.constant 0 : index
      %23 = vector.load %arg6[%c0_11, %c0_12] : memref<32x80xf32, #tpu.memory_space<vmem>>, vector<32x80xf32>
      tpu.vector_store %arg6[%c0_11, %c0_12], %22 {strides = array<i32>} : memref<32x80xf32, #tpu.memory_space<vmem>>, vector<32x80xf32>,
    } else {
    }
    %c1_i32 = arith.constant 1 : i32
    %15 = arith.cmpi eq, %arg1, %c1_i32 : i32
    %16 = arith.extui %15 : i1 to i32
    %c0_i32_6 = arith.constant 0 : i32
    %17 = arith.cmpi ne, %16, %c0_i32_6 : i32
    scf.if %17 {
      %c0 = arith.constant 0 : index
      %c0_7 = arith.constant 0 : index
      %18 = vector.load %arg6[%c0, %c0_7] : memref<32x80xf32, #tpu.memory_space<vmem>>, vector<32x80xf32>
      %19 = vector.shape_cast %18 : vector<32x80xf32> to vector<1x32x80xf32>
      %cst = arith.constant dense<0.000000e+00> : vector<1xf32>
      %20 = vector.multi_reduction <add>, %19, %cst [1, 2] : vector<1x32x80xf32> to vector<1xf32>
      %21 = vector.shape_cast %20 : vector<1xf32> to vector<1x1x1xf32>
      %22 = vector.extract %21[0, 0, 0] : f32 from vector<1x1x1xf32>
      %23 = vector.broadcast %22 : f32 to vector<1x1xf32>
      %cst_8 = arith.constant 1.250000e-02 : f32
      %24 = vector.broadcast %cst_8 : f32 to vector<1x1xf32>
      %25 = arith.mulf %23, %24 : vector<1x1xf32>
      %26 = vector.shape_cast %25 : vector<1x1xf32> to vector<1x1x1xf32>
      %c0_9 = arith.constant 0 : index
      %c0_10 = arith.constant 0 : index
      %c0_11 = arith.constant 0 : index
      %27 = vector.load %arg5[%c0_9, %c0_10, %c0_11] : memref<1x1x1xf32, #tpu.memory_space<vmem>>, vector<1x1x1xf32>
      tpu.vector_store %arg5[%c0_9, %c0_10, %c0_11], %26 {strides = array<i32>} : memref<1x1x1xf32, #tpu.memory_space<vmem>>, vector<1x1x1xf32>,
    } else {
    }
    return
  }
  func.func @transform_0(%arg0: i32, %arg1: i32) -> (i32, i32) {
    %c2_i32 = arith.constant 2 : i32
    %0 = arith.muli %arg0, %c2_i32 : i32
    %1 = arith.addi %0, %arg1 : i32
    %c1_i32 = arith.constant 1 : i32
    %2 = arith.minsi %1, %c1_i32 : i32
    %c0_i32 = arith.constant 0 : i32
    %c0_i32_0 = arith.constant 0 : i32
    return %2, %c0_i32 : i32, i32
  }
  func.func @transform_1(%arg0: i32, %arg1: i32) -> (i32, i32) {
    %c2_i32 = arith.constant 2 : i32
    %0 = arith.muli %arg0, %c2_i32 : i32
    %1 = arith.addi %0, %arg1 : i32
    %c1_i32 = arith.constant 1 : i32
    %2 = arith.minsi %1, %c1_i32 : i32
    %c0_i32 = arith.constant 0 : i32
    %c0_i32_0 = arith.constant 0 : i32
    return %2, %c0_i32 : i32, i32
  }
  func.func @transform_2(%arg0: i32, %arg1: i32) -> (i32, i32) {
    %c2_i32 = arith.constant 2 : i32
    %0 = arith.muli %arg0, %c2_i32 : i32
    %1 = arith.addi %0, %arg1 : i32
    %c1_i32 = arith.constant 1 : i32
    %2 = arith.minsi %1, %c1_i32 : i32
    %c0_i32 = arith.constant 0 : i32
    %c0_i32_0 = arith.constant 0 : i32
    return %2, %c0_i32 : i32, i32
  }
  func.func @transform_3(%arg0: i32, %arg1: i32) -> (i32, i32, i32) {
    %c0_i32 = arith.constant 0 : i32
    %c0_i32_0 = arith.constant 0 : i32
    %c0_i32_1 = arith.constant 0 : i32
    return %arg0, %c0_i32, %c0_i32_0 : i32, i32, i32
  }
}

</mosaic_0001>

<llo_original>
// kernel: tpu_custom_call.1
$region0: #{tpu_custom_call.1}
  #allocation0 [shape = 'u32[]', space=smem, size = 0x4, offset = 0x4, fixed_abs, tag = 'smem constant byte address 0x4 - core index']
  #allocation1 [shape = 'u32[144,128]{1,0:T(1,128)}', space=vmem, size = 0x12000, scoped, tag = 'internal scratch']
  #allocation2 [shape = 'f32[32,80]{1,0:T(8,128)}', space=vmem, size = 0x4000, scoped, tag = 'scratch operand']
  %s0 = inlined_call_operand.vmem [shape: f32[300,80], index: 0, kind: input, shape index: {}]
  %s1 = inlined_call_operand.vmem [shape: f32[300,80], index: 1, kind: input, shape index: {}]
  %s2 = inlined_call_operand.vmem [shape: f32[300,80], index: 2, kind: input, shape index: {}]
  %s3 = inlined_call_operand.hbm [shape: f32[1,1,1], index: 3, kind: output, shape index: {}]
  %s4 = sld [smem:[#allocation0]]
  $region75: #{tpu_custom_call.1} parent=0
    _
  %s6 = ssub.s32 1, %s4
  %s7 = scalar_select 0, %s6, %s4
  $region1: #{tpu_custom_call.1} parent=0
    #allocation3 [shape = 'u8[512]{0}', space=vmem, size = 0x400, scoped, tag = 'output window, operand 0, single buffered']
    #allocation4 [shape = 's32[2]{0}', space=sflag, size = 0x8, scoped, tag = 'scoped memory for tpu_custom_call.1']
    %8 = vsyncpa [#allocation4], 0
    loop: start=0, step=1, limit=4
    $region2: #{tpu_custom_call.1} parent=1 // loop_pre_header
      _
    $region3: #{tpu_custom_call.1} parent=1 // loop_header
      %s10 = sphi 0, %s14
      %p11 = scmp.ge.s32.totalorder %s10, 4
      %s17 = sphi 0, %s29
      %s18 = sphi 0, %s25
      %s19 = sphi 0, %s17
      %s20 = sphi 0, %s18
      %s21 = sphi 0, %s19
      %s22 = sphi 0, %s20
      %s40 = sphi 0, %s42
      %s43 = sphi 0, %s40
      %s44 = sphi 0, %s43
      %s60 = sphi 0, %s44
      %s74 = sphi 0, %s76
      %s77 = sphi 0, %s74
      %s78 = sphi 0, %s77
      %s94 = sphi 0, %s78
      %s108 = sphi 0, %s110
      %s111 = sphi 0, %s108
      %s112 = sphi 0, %s111
      %s128 = sphi 0, %s112
      %s134 = sphi 0, %s136
      %s137 = sphi 0, %s134
      %s138 = sphi 0, %s137
      %s154 = sphi 0, %s138
    $region4: #{tpu_custom_call.1} parent=1 // loop_header_branch
      %13 = sbr.rel (%p11) target = $region8
    $region5: #{tpu_custom_call.1} parent=1 // loop_body
      %s15 = ssub.s32 %s10, 1
      %s16 = ssub.s32 %s10, 2
      %s23 = sadd.s32 1, %s18
      %p24 = scmp.ge.s32.totalorder %s23, 2
      %s25 = scalar_select %p24, 0, %s23
      %s26 = sadd.s32 1, %s17
      %s27 = scalar_select %p24, %s26, %s17
      %p28 = scmp.ge.s32.totalorder %s27, 1
      %s29 = scalar_select %p28, 0, %s27
      %s30 = smul.u32 %s17, 2
      %s31 = sadd.s32 %s30, %s18
      %p32 = scmp.lt.s32.totalorder %s31, 1
      %s33 = scalar_select %p32, %s31, 1
      %s34 = smul.u32 %s29, 2
      %s35 = sadd.s32 %s34, %s25
      %p36 = scmp.lt.s32.totalorder %s35, 1
      %s37 = scalar_select %p36, %s35, 1
      %s38 = ssub.s32 %s33, %s37
      %p39 = scmp.eq.s32.totalorder %s38, 0
      %s41 = sadd.s32 %s40, 1
      %s42 = scalar_select %p39, %s40, %s41
      %p45 = pneg %p39
      %p46 = scmp.eq.s32.totalorder %s10, 1
      %p47 = por %p45, %p46
      %p48 = scmp.ne.s32.totalorder %s40, %s43
      %p49 = scmp.eq.s32.totalorder %s10, 0
      %p50 = por %p48, %p49
      %p51 = scmp.ne.s32.totalorder %s40, %s43
      %p52 = scmp.eq.s32.totalorder %s15, 1
      %p53 = por %p51, %p52
      %p54 = scmp.ne.s32.totalorder %s43, %s44
      %p55 = scmp.eq.s32.totalorder %s15, 0
      %p56 = por %p54, %p55
      %p57 = scmp.ne.s32.totalorder %s43, %s44
      %p58 = scmp.eq.s32.totalorder %s16, 1
      %p59 = por %p57, %p58
      %p61 = scmp.ne.s32.totalorder %s44, %s60
      %p62 = scmp.eq.s32.totalorder %s16, 0
      %p63 = por %p61, %p62
      %s64 = smul.u32 %s17, 2
      %s65 = sadd.s32 %s64, %s18
      %p66 = scmp.lt.s32.totalorder %s65, 1
      %s67 = scalar_select %p66, %s65, 1
      %s68 = smul.u32 %s29, 2
      %s69 = sadd.s32 %s68, %s25
      %p70 = scmp.lt.s32.totalorder %s69, 1
      %s71 = scalar_select %p70, %s69, 1
      %s72 = ssub.s32 %s67, %s71
      %p73 = scmp.eq.s32.totalorder %s72, 0
      %s75 = sadd.s32 %s74, 1
      %s76 = scalar_select %p73, %s74, %s75
      %p79 = pneg %p73
      %p80 = scmp.eq.s32.totalorder %s10, 1
      %p81 = por %p79, %p80
      %p82 = scmp.ne.s32.totalorder %s74, %s77
      %p83 = scmp.eq.s32.totalorder %s10, 0
      %p84 = por %p82, %p83
      %p85 = scmp.ne.s32.totalorder %s74, %s77
      %p86 = scmp.eq.s32.totalorder %s15, 1
      %p87 = por %p85, %p86
      %p88 = scmp.ne.s32.totalorder %s77, %s78
      %p89 = scmp.eq.s32.totalorder %s15, 0
      %p90 = por %p88, %p89
      %p91 = scmp.ne.s32.totalorder %s77, %s78
      %p92 = scmp.eq.s32.totalorder %s16, 1
      %p93 = por %p91, %p92
      %p95 = scmp.ne.s32.totalorder %s78, %s94
      %p96 = scmp.eq.s32.totalorder %s16, 0
      %p97 = por %p95, %p96
      %s98 = smul.u32 %s17, 2
      %s99 = sadd.s32 %s98, %s18
      %p100 = scmp.lt.s32.totalorder %s99, 1
      %s101 = scalar_select %p100, %s99, 1
      %s102 = smul.u32 %s29, 2
      %s103 = sadd.s32 %s102, %s25
      %p104 = scmp.lt.s32.totalorder %s103, 1
      %s105 = scalar_select %p104, %s103, 1
      %s106 = ssub.s32 %s101, %s105
      %p107 = scmp.eq.s32.totalorder %s106, 0
      %s109 = sadd.s32 %s108, 1
      %s110 = scalar_select %p107, %s108, %s109
      %p113 = pneg %p107
      %p114 = scmp.eq.s32.totalorder %s10, 1
      %p115 = por %p113, %p114
      %p116 = scmp.ne.s32.totalorder %s108, %s111
      %p117 = scmp.eq.s32.totalorder %s10, 0
      %p118 = por %p116, %p117
      %p119 = scmp.ne.s32.totalorder %s108, %s111
      %p120 = scmp.eq.s32.totalorder %s15, 1
      %p121 = por %p119, %p120
      %p122 = scmp.ne.s32.totalorder %s111, %s112
      %p123 = scmp.eq.s32.totalorder %s15, 0
      %p124 = por %p122, %p123
      %p125 = scmp.ne.s32.totalorder %s111, %s112
      %p126 = scmp.eq.s32.totalorder %s16, 1
      %p127 = por %p125, %p126
      %p129 = scmp.ne.s32.totalorder %s112, %s128
      %p130 = scmp.eq.s32.totalorder %s16, 0
      %p131 = por %p129, %p130
      %s132 = ssub.s32 %s17, %s29
      %p133 = scmp.eq.s32.totalorder %s132, 0
      %s135 = sadd.s32 %s134, 1
      %s136 = scalar_select %p133, %s134, %s135
      %p139 = pneg %p133
      %p140 = scmp.eq.s32.totalorder %s10, 1
      %p141 = por %p139, %p140
      %p142 = scmp.ne.s32.totalorder %s134, %s137
      %p143 = scmp.eq.s32.totalorder %s10, 0
      %p144 = por %p142, %p143
      %p145 = scmp.ne.s32.totalorder %s134, %s137
      %p146 = scmp.eq.s32.totalorder %s15, 1
      %p147 = por %p145, %p146
      %p148 = scmp.ne.s32.totalorder %s137, %s138
      %p149 = scmp.eq.s32.totalorder %s15, 0
      %p150 = por %p148, %p149
      %p151 = scmp.ne.s32.totalorder %s137, %s138
      %p152 = scmp.eq.s32.totalorder %s16, 1
      %p153 = por %p151, %p152
      %p155 = scmp.ne.s32.totalorder %s138, %s154
      %p156 = scmp.eq.s32.totalorder %s16, 0
      %p157 = por %p155, %p156
      %p158 = scmp.le.s32.totalorder 1, %s10
      %p159 = scmp.lt.s32.totalorder %s10, 3
      %p160 = pnand %p158, %p159
      %p161 = pneg %p160
      // Predicated region
      $region9: #{tpu_custom_call.1} parent=5 // pred_check
        _
      $region10: #{tpu_custom_call.1} parent=5 // pred_check_branch
        %163 = sbr.rel (%p160) target = $region12
      $region11: #{tpu_custom_call.1} parent=5 // pred_region
        %s164 = ssub.s32 %s10, 1
      $region12: #{tpu_custom_call.1} parent=5 // pred_fallthru
        _
      %p165 = scmp.lt.s32.totalorder %s10, 2
      // Predicated region
      $region13: #{tpu_custom_call.1} parent=5 // pred_check
        %p166 = pneg %p165
      $region14: #{tpu_custom_call.1} parent=5 // pred_check_branch
        %168 = sbr.rel (%p166) target = $region16
      $region15: #{tpu_custom_call.1} parent=5 // pred_region
        // Predicated region
        $region17: #{tpu_custom_call.1} parent=15 // pred_check
          %p169 = pneg %p50
        $region18: #{tpu_custom_call.1} parent=15 // pred_check_branch
          %171 = sbr.rel (%p169) target = $region20
        $region19: #{tpu_custom_call.1} parent=15 // pred_region
          %s172 = smul.u32 %s17, 2
          %s173 = sadd.s32 %s172, %s18
          %p174 = scmp.lt.s32.totalorder %s173, 1
          %s175 = scalar_select %p174, %s173, 1
          %s176 = smul.u32 36, %s175
          %s177 = ssub.s32 38, %s176
          %p178 = scmp.lt.s32.totalorder %s177, 36
          %s179 = scalar_select %p178, %s177, 36
          %s180 = smul.u32 128, %s179
          %p181 = scmp.lt.s32.totalorder %s176, 37
          %s182 = scalar_select %p181, %s176, 37
          %s183 = smul.addr %s182, 8
          %s184 = scalar_lea.vmem %s0, %s183
          %s185 = smul.u32 %s17, 2
          %s186 = sadd.s32 %s185, %s18
          %p187 = scmp.lt.s32.totalorder %s186, 1
          %s188 = scalar_select %p187, %s186, 1
          %s189 = smul.u32 36, %s188
          %s190 = ssub.s32 38, %s189
          %p191 = scmp.lt.s32.totalorder %s190, 36
          %s192 = scalar_select %p191, %s190, 36
          %s193 = smul.u32 128, %s192
        $region20: #{tpu_custom_call.1} parent=15 // pred_fallthru
          _
        // Predicated region
        $region21: #{tpu_custom_call.1} parent=15 // pred_check
          %p194 = pneg %p84
        $region22: #{tpu_custom_call.1} parent=15 // pred_check_branch
          %196 = sbr.rel (%p194) target = $region24
        $region23: #{tpu_custom_call.1} parent=15 // pred_region
          %s197 = smul.u32 %s17, 2
          %s198 = sadd.s32 %s197, %s18
          %p199 = scmp.lt.s32.totalorder %s198, 1
          %s200 = scalar_select %p199, %s198, 1
          %s201 = smul.u32 36, %s200
          %s202 = ssub.s32 38, %s201
          %p203 = scmp.lt.s32.totalorder %s202, 36
          %s204 = scalar_select %p203, %s202, 36
          %s205 = smul.u32 128, %s204
          %p206 = scmp.lt.s32.totalorder %s201, 37
          %s207 = scalar_select %p206, %s201, 37
          %s208 = smul.addr %s207, 8
          %s209 = scalar_lea.vmem %s1, %s208
          %s210 = smul.u32 %s17, 2
          %s211 = sadd.s32 %s210, %s18
          %p212 = scmp.lt.s32.totalorder %s211, 1
          %s213 = scalar_select %p212, %s211, 1
          %s214 = smul.u32 36, %s213
          %s215 = ssub.s32 38, %s214
          %p216 = scmp.lt.s32.totalorder %s215, 36
          %s217 = scalar_select %p216, %s215, 36
          %s218 = smul.u32 128, %s217
        $region24: #{tpu_custom_call.1} parent=15 // pred_fallthru
          _
        // Predicated region
        $region25: #{tpu_custom_call.1} parent=15 // pred_check
          %p219 = pneg %p118
        $region26: #{tpu_custom_call.1} parent=15 // pred_check_branch
          %221 = sbr.rel (%p219) target = $region28
        $region27: #{tpu_custom_call.1} parent=15 // pred_region
          %s222 = smul.u32 %s17, 2
          %s223 = sadd.s32 %s222, %s18
          %p224 = scmp.lt.s32.totalorder %s223, 1
          %s225 = scalar_select %p224, %s223, 1
          %s226 = smul.u32 36, %s225
          %s227 = ssub.s32 38, %s226
          %p228 = scmp.lt.s32.totalorder %s227, 36
          %s229 = scalar_select %p228, %s227, 36
          %s230 = smul.u32 128, %s229
          %p231 = scmp.lt.s32.totalorder %s226, 37
          %s232 = scalar_select %p231, %s226, 37
          %s233 = smul.addr %s232, 8
          %s234 = scalar_lea.vmem %s2, %s233
          %s235 = smul.u32 %s17, 2
          %s236 = sadd.s32 %s235, %s18
          %p237 = scmp.lt.s32.totalorder %s236, 1
          %s238 = scalar_select %p237, %s236, 1
          %s239 = smul.u32 36, %s238
          %s240 = ssub.s32 38, %s239
          %p241 = scmp.lt.s32.totalorder %s240, 36
          %s242 = scalar_select %p241, %s240, 36
          %s243 = smul.u32 128, %s242
        $region28: #{tpu_custom_call.1} parent=15 // pred_fallthru
          _
      $region16: #{tpu_custom_call.1} parent=5 // pred_fallthru
        _
      %p244 = scmp.le.s32.totalorder 1, %s10
      %p245 = scmp.lt.s32.totalorder %s10, 3
      %p246 = pnand %p244, %p245
      %p247 = pneg %p246
      // Predicated region
      $region29: #{tpu_custom_call.1} parent=5 // pred_check
        _
      $region30: #{tpu_custom_call.1} parent=5 // pred_check_branch
        %249 = sbr.rel (%p246) target = $region32
      $region31: #{tpu_custom_call.1} parent=5 // pred_region
        %s250 = ssub.s32 %s10, 1
        %s251 = smul.u32 %s19, 2
        %s252 = sadd.s32 %s251, %s20
        %p253 = scmp.lt.s32.totalorder %s252, 1
        %s254 = scalar_select %p253, %s252, 1
        %s255 = smul.u32 36, %s254
        %s256 = ssub.s32 38, %s255
        %p257 = scmp.lt.s32.totalorder %s256, 36
        %s258 = scalar_select %p257, %s256, 36
        %s259 = smul.u32 128, %s258
        %p260 = scmp.lt.s32.totalorder %s255, 37
        %s261 = scalar_select %p260, %s255, 37
        %s262 = smul.addr %s261, 8
        %s263 = scalar_lea.vmem %s0, %s262
        %p264 = pneg %p56
        %p265 = pneg %p53
        %s266 = smul.u32 %s19, 2
        %s267 = sadd.s32 %s266, %s20
        %p268 = scmp.lt.s32.totalorder %s267, 1
        %s269 = scalar_select %p268, %s267, 1
        %s270 = smul.u32 36, %s269
        %s271 = ssub.s32 38, %s270
        %p272 = scmp.lt.s32.totalorder %s271, 36
        %s273 = scalar_select %p272, %s271, 36
        %s274 = smul.u32 128, %s273
        %p275 = scmp.lt.s32.totalorder %s270, 37
        %s276 = scalar_select %p275, %s270, 37
        %s277 = smul.addr %s276, 8
        %s278 = scalar_lea.vmem %s1, %s277
        %p279 = pneg %p90
        %p280 = pneg %p87
        %s281 = smul.u32 %s19, 2
        %s282 = sadd.s32 %s281, %s20
        %p283 = scmp.lt.s32.totalorder %s282, 1
        %s284 = scalar_select %p283, %s282, 1
        %s285 = smul.u32 36, %s284
        %s286 = ssub.s32 38, %s285
        %p287 = scmp.lt.s32.totalorder %s286, 36
        %s288 = scalar_select %p287, %s286, 36
        %s289 = smul.u32 128, %s288
        %p290 = scmp.lt.s32.totalorder %s285, 37
        %s291 = scalar_select %p290, %s285, 37
        %s292 = smul.addr %s291, 8
        %s293 = scalar_lea.vmem %s2, %s292
        %p294 = pneg %p124
        %p295 = pneg %p121
        %p296 = pneg %p150
        %p297 = pneg %p147
        %s298 = smul.u32 %s19, 2
        %s299 = sadd.s32 %s298, %s20
        %p300 = scmp.lt.s32.totalorder %s299, 1
        %s301 = scalar_select %p300, %s299, 1
        %s302 = smul.u32 36, %s301
        %s303 = ssub.s32 38, %s302
        %p304 = scmp.lt.s32.totalorder %s303, 36
        %s305 = scalar_select %p304, %s303, 36
        %s306 = smul.u32 128, %s305
        %p307 = scmp.lt.s32.totalorder %s302, 37
        %s308 = scalar_select %p307, %s302, 37
        %s309 = smul.addr %s308, 8
        %s310 = scalar_lea.vmem %s0, %s309
        %s311 = smul.u32 %s19, 2
        %s312 = sadd.s32 %s311, %s20
        %p313 = scmp.lt.s32.totalorder %s312, 1
        %s314 = scalar_select %p313, %s312, 1
        %s315 = smul.u32 36, %s314
        %s316 = ssub.s32 38, %s315
        %p317 = scmp.lt.s32.totalorder %s316, 36
        %s318 = scalar_select %p317, %s316, 36
        %s319 = smul.u32 128, %s318
        %s320 = smul.u32 %s19, 2
        %s321 = sadd.s32 %s320, %s20
        %p322 = scmp.lt.s32.totalorder %s321, 1
        %s323 = scalar_select %p322, %s321, 1
        %s324 = smul.u32 36, %s323
        %s325 = ssub.s32 38, %s324
        %p326 = scmp.lt.s32.totalorder %s325, 36
        %s327 = scalar_select %p326, %s325, 36
        %s328 = smul.u32 128, %s327
        %p329 = scmp.lt.s32.totalorder %s324, 37
        %s330 = scalar_select %p329, %s324, 37
        %s331 = smul.addr %s330, 8
        %s332 = scalar_lea.vmem %s1, %s331
        %s333 = smul.u32 %s19, 2
        %s334 = sadd.s32 %s333, %s20
        %p335 = scmp.lt.s32.totalorder %s334, 1
        %s336 = scalar_select %p335, %s334, 1
        %s337 = smul.u32 36, %s336
        %s338 = ssub.s32 38, %s337
        %p339 = scmp.lt.s32.totalorder %s338, 36
        %s340 = scalar_select %p339, %s338, 36
        %s341 = smul.u32 128, %s340
        %s342 = smul.u32 %s19, 2
        %s343 = sadd.s32 %s342, %s20
        %p344 = scmp.lt.s32.totalorder %s343, 1
        %s345 = scalar_select %p344, %s343, 1
        %s346 = smul.u32 36, %s345
        %s347 = ssub.s32 38, %s346
        %p348 = scmp.lt.s32.totalorder %s347, 36
        %s349 = scalar_select %p348, %s347, 36
        %s350 = smul.u32 128, %s349
        %p351 = scmp.lt.s32.totalorder %s346, 37
        %s352 = scalar_select %p351, %s346, 37
        %s353 = smul.addr %s352, 8
        %s354 = scalar_lea.vmem %s2, %s353
        %s355 = smul.u32 %s19, 2
        %s356 = sadd.s32 %s355, %s20
        %p357 = scmp.lt.s32.totalorder %s356, 1
        %s358 = scalar_select %p357, %s356, 1
        %s359 = smul.u32 36, %s358
        %s360 = ssub.s32 38, %s359
        %p361 = scmp.lt.s32.totalorder %s360, 36
        %s362 = scalar_select %p361, %s360, 36
        %s363 = smul.u32 128, %s362
        %s364 = smul.u32 %s19, 2
        %s365 = sadd.s32 %s364, %s20
        %s366 = smul.u32 %s365, 288
        %s367 = sadd.s32 %s366, 288
        %p368 = scmp.eq.s32.totalorder %s20, 0
        // Predicated region
        $region33: #{tpu_custom_call.1} parent=31 // pred_check
          %p369 = pneg %p368
        $region34: #{tpu_custom_call.1} parent=31 // pred_check_branch
          %371 = sbr.rel (%p369) target = $region36
        $region35: #{tpu_custom_call.1} parent=31 // pred_region
          %vm372 = vcmask 654336
          %373 = vst.msk [vmem:[#allocation2] sm:$0xff] %vm372, 0.0
          %374 = vst.msk [vmem:[#allocation2 + $0x8] sm:$0xff] %vm372, 0.0
          %375 = vst.msk [vmem:[#allocation2 + $0x10] sm:$0xff] %vm372, 0.0
          %376 = vst.msk [vmem:[#allocation2 + $0x18] sm:$0xff] %vm372, 0.0
        $region36: #{tpu_custom_call.1} parent=31 // pred_fallthru
          _
        %p377 = scmp.le.s32.totalorder %s367, 300
        // Predicated region
        $region37: #{tpu_custom_call.1} parent=31 // pred_check
          %p378 = pneg %p377
        $region38: #{tpu_custom_call.1} parent=31 // pred_check_branch
          %380 = sbr.rel (%p378) target = $region40
        $region39: #{tpu_custom_call.1} parent=31 // pred_region
          loop: start=0, step=1, limit=9
          $region41: #{tpu_custom_call.1} parent=39 // loop_pre_header
            _
          $region42: #{tpu_custom_call.1} parent=39 // loop_header
            %s382 = sphi 0, %s386
            %p383 = scmp.ge.s32.totalorder %s382, 9
            %v387 = vphi 0.0, %v519
            %v388 = vphi 0.0, %v520
            %v389 = vphi 0.0, %v521
            %v390 = vphi 0.0, %v522
          $region43: #{tpu_custom_call.1} parent=39 // loop_header_branch
            %385 = sbr.rel (%p383) target = $region47
          $region44: #{tpu_custom_call.1} parent=39 // loop_body
            %s391 = smul.u32 %s382, 32
            %s392 = scalar_lea.vmem %s310, %s391
            %v393 = vld [vmem:[%s392] sm:$0xff]
            %v394 = vld [vmem:[%s392 + $0x8] sm:$0xff]
            %v395 = vld [vmem:[%s392 + $0x10] sm:$0xff]
            %v396 = vld [vmem:[%s392 + $0x18] sm:$0xff]
            %s397 = scalar_lea.vmem %s332, %s391
            %v398 = vld [vmem:[%s397] sm:$0xff]
            %v399 = vld [vmem:[%s397 + $0x8] sm:$0xff]
            %v400 = vld [vmem:[%s397 + $0x10] sm:$0xff]
            %v401 = vld [vmem:[%s397 + $0x18] sm:$0xff]
            %s402 = scalar_lea.vmem %s354, %s391
            %v403 = vld [vmem:[%s402] sm:$0xff]
            %v404 = vld [vmem:[%s402 + $0x8] sm:$0xff]
            %v405 = vld [vmem:[%s402 + $0x10] sm:$0xff]
            %v406 = vld [vmem:[%s402 + $0x18] sm:$0xff]
            %v407 = vand.u32 2147483647, %v393
            %v408 = vand.u32 2147483647, %v394
            %v409 = vand.u32 2147483647, %v395
            %v410 = vand.u32 2147483647, %v396
            %v411 = vsub.f32 0.0, %v407
            %v412 = vsub.f32 0.0, %v408
            %v413 = vsub.f32 0.0, %v409
            %v414 = vsub.f32 0.0, %v410
            %v415 = vmul.f32 %v411, 1.442695
            %v416 = vpow.pop %v415
            %v417 = vmul.f32 %v412, 1.442695
            %v418 = vpow.pop %v417
            %v419 = vmul.f32 %v413, 1.442695
            %v420 = vpow.pop %v419
            %v421 = vmul.f32 %v414, 1.442695
            %v422 = vpow.pop %v421
            %v423 = vadd.f32 %v416, 1.0
            %v424 = vlog2.pop %v423
            %v425 = vmul.f32 %v424, 0.6931472
            %v426 = vmul.f32 -0.5, %v416
            %v427 = vadd.f32 %v426, 1.0
            %v428 = vmul.f32 %v427, %v416
            %v429 = vand.u32 2147483647, %v416
            %vm430 = vcmp.lt.f32.partialorder %v429, 0.0004427343
            %v431 = vsel %vm430, %v428, %v425
            %v432 = vadd.f32 %v418, 1.0
            %v433 = vlog2.pop %v432
            %v434 = vmul.f32 %v433, 0.6931472
            %v435 = vmul.f32 -0.5, %v418
            %v436 = vadd.f32 %v435, 1.0
            %v437 = vmul.f32 %v436, %v418
            %v438 = vand.u32 2147483647, %v418
            %vm439 = vcmp.lt.f32.partialorder %v438, 0.0004427343
            %v440 = vsel %vm439, %v437, %v434
            %v441 = vadd.f32 %v420, 1.0
            %v442 = vlog2.pop %v441
            %v443 = vmul.f32 %v442, 0.6931472
            %v444 = vmul.f32 -0.5, %v420
            %v445 = vadd.f32 %v444, 1.0
            %v446 = vmul.f32 %v445, %v420
            %v447 = vand.u32 2147483647, %v420
            %vm448 = vcmp.lt.f32.partialorder %v447, 0.0004427343
            %v449 = vsel %vm448, %v446, %v443
            %v450 = vadd.f32 %v422, 1.0
            %v451 = vlog2.pop %v450
            %v452 = vmul.f32 %v451, 0.6931472
            %v453 = vmul.f32 -0.5, %v422
            %v454 = vadd.f32 %v453, 1.0
            %v455 = vmul.f32 %v454, %v422
            %v456 = vand.u32 2147483647, %v422
            %vm457 = vcmp.lt.f32.partialorder %v456, 0.0004427343
            %v458 = vsel %vm457, %v455, %v452
            %vm459 = vcmp.ge.f32.partialorder %v393, 0.0
            %vm460 = vcmp.ge.f32.partialorder %v394, 0.0
            %vm461 = vcmp.ge.f32.partialorder %v395, 0.0
            %vm462 = vcmp.ge.f32.partialorder %v396, 0.0
            %v463 = vsel %vm459, 1.0, %v416
            %v464 = vsel %vm460, 1.0, %v418
            %v465 = vsel %vm461, 1.0, %v420
            %v466 = vsel %vm462, 1.0, %v422
            %v467 = vadd.f32 %v416, 1.0
            %v468 = vadd.f32 %v418, 1.0
            %v469 = vadd.f32 %v420, 1.0
            %v470 = vadd.f32 %v422, 1.0
            %v471 = vrcp.pop %v467
            %v472 = vrcp.pop %v468
            %v473 = vrcp.pop %v469
            %v474 = vrcp.pop %v470
            %v475 = vmul.f32 %v463, %v471
            %v476 = vmul.f32 %v464, %v472
            %v477 = vmul.f32 %v465, %v473
            %v478 = vmul.f32 %v466, %v474
            %v479 = vmul.f32 %v475, %v475
            %v480 = vmul.f32 %v476, %v476
            %v481 = vmul.f32 %v477, %v477
            %v482 = vmul.f32 %v478, %v478
            %v483 = vmul.f32 %v479, 0.75
            %v484 = vmul.f32 %v480, 0.75
            %v485 = vmul.f32 %v481, 0.75
            %v486 = vmul.f32 %v482, 0.75
            %v487 = vsub.f32 %v398, %v483
            %v488 = vsub.f32 %v399, %v484
            %v489 = vsub.f32 %v400, %v485
            %v490 = vsub.f32 %v401, %v486
            %v491 = vmul.f32 %v403, %v487
            %v492 = vmul.f32 %v404, %v488
            %v493 = vmul.f32 %v405, %v489
            %v494 = vmul.f32 %v406, %v490
            %v495 = vadd.f32 %v483, %v491
            %v496 = vadd.f32 %v484, %v492
            %v497 = vadd.f32 %v485, %v493
            %v498 = vadd.f32 %v486, %v494
            %v499 = vmax.f32 %v393, 0.0
            %v500 = vmax.f32 %v394, 0.0
            %v501 = vmax.f32 %v395, 0.0
            %v502 = vmax.f32 %v396, 0.0
            %v503 = vmul.f32 %v393, %v398
            %v504 = vmul.f32 %v394, %v399
            %v505 = vmul.f32 %v395, %v400
            %v506 = vmul.f32 %v396, %v401
            %v507 = vsub.f32 %v499, %v503
            %v508 = vsub.f32 %v500, %v504
            %v509 = vsub.f32 %v501, %v505
            %v510 = vsub.f32 %v502, %v506
            %v511 = vadd.f32 %v507, %v431
            %v512 = vadd.f32 %v508, %v440
            %v513 = vadd.f32 %v509, %v449
            %v514 = vadd.f32 %v510, %v458
            %v515 = vmul.f32 %v511, %v495
            %v516 = vmul.f32 %v512, %v496
            %v517 = vmul.f32 %v513, %v497
            %v518 = vmul.f32 %v514, %v498
            %v519 = vadd.f32 %v387, %v515
            %v520 = vadd.f32 %v388, %v516
            %v521 = vadd.f32 %v389, %v517
            %v522 = vadd.f32 %v390, %v518
          $region45: #{tpu_custom_call.1} parent=39 // loop_footer
            %s386 = sadd.s32 1, %s382
          $region46: #{tpu_custom_call.1} parent=39 // loop_footer_branch
            %381 = sbr.rel target = $region42
          $region47: #{tpu_custom_call.1} parent=39 // loop_exit
            _
          %v523 = vld [vmem:[#allocation2] sm:$0xff]
          %v524 = vld [vmem:[#allocation2 + $0x8] sm:$0xff]
          %v525 = vld [vmem:[#allocation2 + $0x10] sm:$0xff]
          %v526 = vld [vmem:[#allocation2 + $0x18] sm:$0xff]
          %v527 = vadd.f32 %v523, %v387
          %v528 = vadd.f32 %v524, %v388
          %v529 = vadd.f32 %v525, %v389
          %v530 = vadd.f32 %v526, %v390
          %vm531 = vcmask 654336
          %532 = vst.msk [vmem:[#allocation2] sm:$0xff] %vm531, %v527
          %533 = vst.msk [vmem:[#allocation2 + $0x8] sm:$0xff] %vm531, %v528
          %534 = vst.msk [vmem:[#allocation2 + $0x10] sm:$0xff] %vm531, %v529
          %535 = vst.msk [vmem:[#allocation2 + $0x18] sm:$0xff] %vm531, %v530
        $region40: #{tpu_custom_call.1} parent=31 // pred_fallthru
          _
        %p536 = scmp.lt.s32.totalorder %s366, 300
        %p537 = scmp.gt.s32.totalorder %s367, 300
        %p538 = pnand %p536, %p537
        %p539 = pneg %p538
        // Predicated region
        $region48: #{tpu_custom_call.1} parent=31 // pred_check
          _
        $region49: #{tpu_custom_call.1} parent=31 // pred_check_branch
          %541 = sbr.rel (%p538) target = $region51
        $region50: #{tpu_custom_call.1} parent=31 // pred_region
          loop: start=0, step=1, limit=9
          $region52: #{tpu_custom_call.1} parent=50 // loop_pre_header
            _
          $region53: #{tpu_custom_call.1} parent=50 // loop_header
            %s543 = sphi 0, %s547
            %p544 = scmp.ge.s32.totalorder %s543, 9
            %v548 = vphi 0.0, %v699
            %v549 = vphi 0.0, %v700
            %v550 = vphi 0.0, %v701
            %v551 = vphi 0.0, %v702
          $region54: #{tpu_custom_call.1} parent=50 // loop_header_branch
            %546 = sbr.rel (%p544) target = $region58
          $region55: #{tpu_custom_call.1} parent=50 // loop_body
            %s552 = smul.u32 %s543, 32
            %s553 = scalar_lea.vmem %s310, %s552
            %v554 = vld [vmem:[%s553] sm:$0xff]
            %v555 = vld [vmem:[%s553 + $0x8] sm:$0xff]
            %v556 = vld [vmem:[%s553 + $0x10] sm:$0xff]
            %v557 = vld [vmem:[%s553 + $0x18] sm:$0xff]
            %s558 = scalar_lea.vmem %s332, %s552
            %v559 = vld [vmem:[%s558] sm:$0xff]
            %v560 = vld [vmem:[%s558 + $0x8] sm:$0xff]
            %v561 = vld [vmem:[%s558 + $0x10] sm:$0xff]
            %v562 = vld [vmem:[%s558 + $0x18] sm:$0xff]
            %s563 = scalar_lea.vmem %s354, %s552
            %v564 = vld [vmem:[%s563] sm:$0xff]
            %v565 = vld [vmem:[%s563 + $0x8] sm:$0xff]
            %v566 = vld [vmem:[%s563 + $0x10] sm:$0xff]
            %v567 = vld [vmem:[%s563 + $0x18] sm:$0xff]
            %v568 = vand.u32 2147483647, %v554
            %v569 = vand.u32 2147483647, %v555
            %v570 = vand.u32 2147483647, %v556
            %v571 = vand.u32 2147483647, %v557
            %v572 = vsub.f32 0.0, %v568
            %v573 = vsub.f32 0.0, %v569
            %v574 = vsub.f32 0.0, %v570
            %v575 = vsub.f32 0.0, %v571
            %v576 = vmul.f32 %v572, 1.442695
            %v577 = vpow.pop %v576
            %v578 = vmul.f32 %v573, 1.442695
            %v579 = vpow.pop %v578
            %v580 = vmul.f32 %v574, 1.442695
            %v581 = vpow.pop %v580
            %v582 = vmul.f32 %v575, 1.442695
            %v583 = vpow.pop %v582
            %v584 = vadd.f32 %v577, 1.0
            %v585 = vlog2.pop %v584
            %v586 = vmul.f32 %v585, 0.6931472
            %v587 = vmul.f32 -0.5, %v577
            %v588 = vadd.f32 %v587, 1.0
            %v589 = vmul.f32 %v588, %v577
            %v590 = vand.u32 2147483647, %v577
            %vm591 = vcmp.lt.f32.partialorder %v590, 0.0004427343
            %v592 = vsel %vm591, %v589, %v586
            %v593 = vadd.f32 %v579, 1.0
            %v594 = vlog2.pop %v593
            %v595 = vmul.f32 %v594, 0.6931472
            %v596 = vmul.f32 -0.5, %v579
            %v597 = vadd.f32 %v596, 1.0
            %v598 = vmul.f32 %v597, %v579
            %v599 = vand.u32 2147483647, %v579
            %vm600 = vcmp.lt.f32.partialorder %v599, 0.0004427343
            %v601 = vsel %vm600, %v598, %v595
            %v602 = vadd.f32 %v581, 1.0
            %v603 = vlog2.pop %v602
            %v604 = vmul.f32 %v603, 0.6931472
            %v605 = vmul.f32 -0.5, %v581
            %v606 = vadd.f32 %v605, 1.0
            %v607 = vmul.f32 %v606, %v581
            %v608 = vand.u32 2147483647, %v581
            %vm609 = vcmp.lt.f32.partialorder %v608, 0.0004427343
            %v610 = vsel %vm609, %v607, %v604
            %v611 = vadd.f32 %v583, 1.0
            %v612 = vlog2.pop %v611
            %v613 = vmul.f32 %v612, 0.6931472
            %v614 = vmul.f32 -0.5, %v583
            %v615 = vadd.f32 %v614, 1.0
            %v616 = vmul.f32 %v615, %v583
            %v617 = vand.u32 2147483647, %v583
            %vm618 = vcmp.lt.f32.partialorder %v617, 0.0004427343
            %v619 = vsel %vm618, %v616, %v613
            %vm620 = vcmp.ge.f32.partialorder %v554, 0.0
            %vm621 = vcmp.ge.f32.partialorder %v555, 0.0
            %vm622 = vcmp.ge.f32.partialorder %v556, 0.0
            %vm623 = vcmp.ge.f32.partialorder %v557, 0.0
            %v624 = vsel %vm620, 1.0, %v577
            %v625 = vsel %vm621, 1.0, %v579
            %v626 = vsel %vm622, 1.0, %v581
            %v627 = vsel %vm623, 1.0, %v583
            %v628 = vadd.f32 %v577, 1.0
            %v629 = vadd.f32 %v579, 1.0
            %v630 = vadd.f32 %v581, 1.0
            %v631 = vadd.f32 %v583, 1.0
            %v632 = vrcp.pop %v628
            %v633 = vrcp.pop %v629
            %v634 = vrcp.pop %v630
            %v635 = vrcp.pop %v631
            %v636 = vmul.f32 %v624, %v632
            %v637 = vmul.f32 %v625, %v633
            %v638 = vmul.f32 %v626, %v634
            %v639 = vmul.f32 %v627, %v635
            %v640 = vmul.f32 %v636, %v636
            %v641 = vmul.f32 %v637, %v637
            %v642 = vmul.f32 %v638, %v638
            %v643 = vmul.f32 %v639, %v639
            %v644 = vmul.f32 %v640, 0.75
            %v645 = vmul.f32 %v641, 0.75
            %v646 = vmul.f32 %v642, 0.75
            %v647 = vmul.f32 %v643, 0.75
            %v648 = vsub.f32 %v559, %v644
            %v649 = vsub.f32 %v560, %v645
            %v650 = vsub.f32 %v561, %v646
            %v651 = vsub.f32 %v562, %v647
            %v652 = vmul.f32 %v564, %v648
            %v653 = vmul.f32 %v565, %v649
            %v654 = vmul.f32 %v566, %v650
            %v655 = vmul.f32 %v567, %v651
            %v656 = vadd.f32 %v644, %v652
            %v657 = vadd.f32 %v645, %v653
            %v658 = vadd.f32 %v646, %v654
            %v659 = vadd.f32 %v647, %v655
            %v660 = vmax.f32 %v554, 0.0
            %v661 = vmax.f32 %v555, 0.0
            %v662 = vmax.f32 %v556, 0.0
            %v663 = vmax.f32 %v557, 0.0
            %v664 = vmul.f32 %v554, %v559
            %v665 = vmul.f32 %v555, %v560
            %v666 = vmul.f32 %v556, %v561
            %v667 = vmul.f32 %v557, %v562
            %v668 = vsub.f32 %v660, %v664
            %v669 = vsub.f32 %v661, %v665
            %v670 = vsub.f32 %v662, %v666
            %v671 = vsub.f32 %v663, %v667
            %v672 = vadd.f32 %v668, %v592
            %v673 = vadd.f32 %v669, %v601
            %v674 = vadd.f32 %v670, %v610
            %v675 = vadd.f32 %v671, %v619
            %v676 = vmul.f32 %v672, %v656
            %v677 = vmul.f32 %v673, %v657
            %v678 = vmul.f32 %v674, %v658
            %v679 = vmul.f32 %v675, %v659
            %s680 = sadd.s32 %s366, %s552
            %v681 = vlaneseq
            %v682 = vshrl.u32 %v681, 7
            %v683 = vadd.s32 %v682, 8
            %v684 = vadd.s32 %v682, 16
            %v685 = vadd.s32 %v682, 24
            %v686 = vstv %s680
            %v687 = vadd.s32 %v686, %v682
            %v688 = vadd.s32 %v686, %v683
            %v689 = vadd.s32 %v686, %v684
            %v690 = vadd.s32 %v686, %v685
            %vm691 = vcmp.lt.s32.totalorder %v687, 300
            %vm692 = vcmp.lt.s32.totalorder %v688, 300
            %vm693 = vcmp.lt.s32.totalorder %v689, 300
            %vm694 = vcmp.lt.s32.totalorder %v690, 300
            %v695 = vsel %vm691, %v676, 0.0
            %v696 = vsel %vm692, %v677, 0.0
            %v697 = vsel %vm693, %v678, 0.0
            %v698 = vsel %vm694, %v679, 0.0
            %v699 = vadd.f32 %v548, %v695
            %v700 = vadd.f32 %v549, %v696
            %v701 = vadd.f32 %v550, %v697
            %v702 = vadd.f32 %v551, %v698
          $region56: #{tpu_custom_call.1} parent=50 // loop_footer
            %s547 = sadd.s32 1, %s543
          $region57: #{tpu_custom_call.1} parent=50 // loop_footer_branch
            %542 = sbr.rel target = $region53
          $region58: #{tpu_custom_call.1} parent=50 // loop_exit
            _
          %v703 = vld [vmem:[#allocation2] sm:$0xff]
          %v704 = vld [vmem:[#allocation2 + $0x8] sm:$0xff]
          %v705 = vld [vmem:[#allocation2 + $0x10] sm:$0xff]
          %v706 = vld [vmem:[#allocation2 + $0x18] sm:$0xff]
          %v707 = vadd.f32 %v703, %v548
          %v708 = vadd.f32 %v704, %v549
          %v709 = vadd.f32 %v705, %v550
          %v710 = vadd.f32 %v706, %v551
          %vm711 = vcmask 654336
          %712 = vst.msk [vmem:[#allocation2] sm:$0xff] %vm711, %v707
          %713 = vst.msk [vmem:[#allocation2 + $0x8] sm:$0xff] %vm711, %v708
          %714 = vst.msk [vmem:[#allocation2 + $0x10] sm:$0xff] %vm711, %v709
          %715 = vst.msk [vmem:[#allocation2 + $0x18] sm:$0xff] %vm711, %v710
        $region51: #{tpu_custom_call.1} parent=31 // pred_fallthru
          _
        %p716 = scmp.eq.s32.totalorder %s20, 1
        // Predicated region
        $region59: #{tpu_custom_call.1} parent=31 // pred_check
          %p717 = pneg %p716
        $region60: #{tpu_custom_call.1} parent=31 // pred_check_branch
          %719 = sbr.rel (%p717) target = $region62
        $region61: #{tpu_custom_call.1} parent=31 // pred_region
          %v720 = vld [vmem:[#allocation2] sm:$0xff]
          %v721 = vld [vmem:[#allocation2 + $0x8] sm:$0xff]
          %v722 = vld [vmem:[#allocation2 + $0x10] sm:$0xff]
          %v723 = vld [vmem:[#allocation2 + $0x18] sm:$0xff]
          %vm724 = vcmask 654336
          %v725 = vsel %vm724, %v720, 0.0
          %v726 = vsel %vm724, %v721, 0.0
          %v727 = vadd.f32 %v725, %v726
          %v728 = vsel %vm724, %v722, 0.0
          %v729 = vadd.f32 %v727, %v728
          %v730 = vsel %vm724, %v723, 0.0
          %v731 = vadd.f32 %v729, %v730
          %732 = vadd.xlane.f32.xlu0 %v731
          %v733 = vpop.xlane.xlu0 %732
          %v734 = vrot.slane %v733, 4
          %v735 = vadd.f32 %v733, %v734
          %v736 = vrot.slane %v735, 2
          %v737 = vadd.f32 %v735, %v736
          %v738 = vrot.slane %v737, 1
          %v739 = vadd.f32 %v737, %v738
          %s740 = vtos %v739
          %v741 = vstv %s740
          %v742 = vmul.f32 %v741, 0.0125
          %vm743 = vcmask 0
          %744 = vst.msk [vmem:[#allocation3] sm:$0x1] %vm743, %v742
        $region62: #{tpu_custom_call.1} parent=31 // pred_fallthru
          _
        // Predicated region
        $region63: #{tpu_custom_call.1} parent=31 // pred_check
          %p745 = pneg %p147
        $region64: #{tpu_custom_call.1} parent=31 // pred_check_branch
          %747 = sbr.rel (%p745) target = $region66
        $region65: #{tpu_custom_call.1} parent=31 // pred_region
          %s749 = ssub.s32 16, 16
          %750 = vsyncadd [#allocation4], %s749
          %s751 = smul.addr %s19, 16
          %s752 = scalar_lea.hbm %s3, %s751
          %s754 = sshll.u32 [#allocation3], 4
          %s755 = int_to_ptr.vmem [resolvable:$true] %s754
          %757 = dma.vmem_to_hbm [thread:$0]  %s755, 16, %s752, [#allocation4]
        $region66: #{tpu_custom_call.1} parent=31 // pred_fallthru
          _
        // Predicated region
        $region67: #{tpu_custom_call.1} parent=31 // pred_check
          %p758 = pneg %p147
        $region68: #{tpu_custom_call.1} parent=31 // pred_check_branch
          %760 = sbr.rel (%p758) target = $region70
        $region69: #{tpu_custom_call.1} parent=31 // pred_region
          %761 = dma.done [#allocation4], 16
        $region70: #{tpu_custom_call.1} parent=31 // pred_fallthru
          _
      $region32: #{tpu_custom_call.1} parent=5 // pred_fallthru
        _
      %p762 = scmp.le.s32.totalorder 2, %s10
      // Predicated region
      $region71: #{tpu_custom_call.1} parent=5 // pred_check
        %p763 = pneg %p762
      $region72: #{tpu_custom_call.1} parent=5 // pred_check_branch
        %765 = sbr.rel (%p763) target = $region74
      $region73: #{tpu_custom_call.1} parent=5 // pred_region
        %s766 = ssub.s32 %s10, 2
      $region74: #{tpu_custom_call.1} parent=5 // pred_fallthru
        _
    $region6: #{tpu_custom_call.1} parent=1 // loop_footer
      %s14 = sadd.s32 1, %s10
    $region7: #{tpu_custom_call.1} parent=1 // loop_footer_branch
      %9 = sbr.rel target = $region3
    $region8: #{tpu_custom_call.1} parent=1 // loop_exit
      _
    %767 = vsyncpa [#allocation4], 1
    %s768 = scalar_lea.sflag [#allocation4], 1
    %769 = vsyncpa %s768, 1

</llo_original>
